<compile_context>
chip_gen: v5e
topology: v5e:2x2
jax: 0.10.0
libtpu: 0.0.40
codegen_flags: <defaults>
</compile_context>

<pallas_src>
import functools
import math

import jax
import jax.numpy as jnp
from jax.experimental import pallas as pl
from jax.experimental.pallas import tpu as pltpu

_LOG2 = 0.6931471805599453  # ln(2), compile-time constant
_LANES = 128
_MIN_PALLAS_ELEMS = 1024    # below this, kernel-launch overhead > any possible win


def _softplus_shift_xla(x):
    """Fused-XLA path for tiny or non-lane-aligned tensors (1 read + 1 write)."""
    xf = x.astype(jnp.float32)
    out = jnp.maximum(xf, 0.0) + jnp.log1p(jnp.exp(-jnp.abs(xf))) - _LOG2
    return out.astype(x.dtype)


def _shifted_softplus_kernel(x_ref, o_ref, *, compute_dtype):
    x = x_ref[...].astype(compute_dtype)
    # Numerically stable softplus: max(x, 0) + log1p(exp(-|x|)); then shift by ln(2).
    sp = jnp.maximum(x, 0.0) + jnp.log1p(jnp.exp(-jnp.abs(x)))
    o_ref[...] = (sp - jnp.asarray(_LOG2, dtype=compute_dtype)).astype(o_ref.dtype)


def _vmem_capacity_bytes():
    try:
        return int(pltpu.get_tpu_info().vmem_capacity_bytes)
    except Exception:
        return 64 << 20  # conservative (v7x-sized) default


def _has_native_bf16_eup():
    """bf16 VPU/EUP paths exist on v6e and later; v5e and older need f32 compute."""
    try:
        kind = jax.devices()[0].device_kind.lower()
    except Exception:
        return False
    return not any(f"v{g}" in kind for g in (2, 3, 4, 5))


def shifted_softplus(x: jax.Array) -> jax.Array:
    """Elementwise shifted softplus: softplus(x) - ln(2). Any shape / float dtype."""
    n = x.size
    if n == 0:
        return x
    # Tiny tensors (launch overhead dominates) and lane-unaligned sizes (would need a
    # full-tensor pad + slice round trip) use the fused XLA path instead.
    if n < _MIN_PALLAS_ELEMS or n % _LANES != 0:
        return _softplus_shift_xla(x)

    orig_shape = x.shape
    itemsize = jnp.dtype(x.dtype).itemsize
    sublane_q = 8 * max(1, 4 // itemsize)      # 8 (f32) / 16 (bf16) / 32 (8-bit)

    # Lane-dense 2-D view of the flat tensor; blocks span the full 128-lane width so
    # every block is contiguous in HBM and stores are unmasked (except the boundary).
    rows = n // _LANES
    x2d = jnp.ravel(x).reshape(rows, _LANES)
    bytes_per_row = _LANES * itemsize

    # Generation-aware block size: large blocks amortize the ~0.35 us per-grid-step
    # overhead; capped so in+out double buffering plus elementwise temporaries fit VMEM.
    vmem_cap = _vmem_capacity_bytes()
    block_bytes = max(1 << 20, min(8 << 20, vmem_cap // 16))
    tr = block_bytes // bytes_per_row
    # Keep >= 4 grid steps when the tensor is big enough (2 TCs on v7x + pipelining).
    tr = min(tr, pl.cdiv(rows, 4))
    tr = (tr // sublane_q) * sublane_q
    if tr <= 0 or tr >= rows:
        tr = rows                              # single full-extent block (always legal)
    grid = (pl.cdiv(rows, tr),)                # boundary block (if any) is masked

    vmem_limit = int(min(3 * vmem_cap // 4, max(48 << 20, 8 * block_bytes)))

    def run(compute_dtype):
        return pl.pallas_call(
            functools.partial(_shifted_softplus_kernel, compute_dtype=compute_dtype),
            out_shape=jax.ShapeDtypeStruct((rows, _LANES), x.dtype),
            grid=grid,
            in_specs=[pl.BlockSpec((tr, _LANES), lambda i: (i, 0))],
            out_specs=pl.BlockSpec((tr, _LANES), lambda i: (i, 0)),
            compiler_params=pltpu.CompilerParams(
                dimension_semantics=("parallel",),
                vmem_limit_bytes=vmem_limit,
            ),
        )(x2d)

    if x.dtype == jnp.bfloat16 and _has_native_bf16_eup():
        try:
            out2d = run(jnp.bfloat16)          # native bf16 EUP on v6e/v7x
        except Exception:
            out2d = run(jnp.float32)           # toolchain lacks bf16 lowering -> f32
    else:
        out2d = run(jnp.float32)               # f32 compute (v5e has no bf16 VPU/EUP)

    return out2d.reshape(orig_shape)


class ShiftedSoftplus:
    """Mirror of the PyTorch ShiftedSoftplus module (no learnable parameters)."""

    def __init__(self):
        self.shift = math.log(2.0)

    def __call__(self, x):
        return shifted_softplus(x)


if __name__ == "__main__":
    module = ShiftedSoftplus()

    # Primary shape implied by the module's typical use (NCHW-like activation).
    x = jax.random.normal(jax.random.PRNGKey(0), (2, 4, 16, 16), dtype=jnp.float32) * 3.0
    out = jax.block_until_ready(module(x))
    ref = jax.nn.softplus(x) - module.shift
    assert out.shape == x.shape and out.dtype == x.dtype
    assert float(jnp.max(jnp.abs(out - ref))) < 1e-5

    # Larger tensor: exercises the multi-block grid and the masked boundary block.
    x2 = jax.random.normal(jax.random.PRNGKey(1), (37, 8, 128), dtype=jnp.float32) * 2.0
    out2 = jax.block_until_ready(module(x2))
    ref2 = jax.nn.softplus(x2) - module.shift
    assert out2.shape == x2.shape
    assert float(jnp.max(jnp.abs(out2 - ref2))) < 1e-5

    # bf16: native bf16 compute on v6e/v7x, f32 compute on v5e and older.
    x3 = jax.random.normal(jax.random.PRNGKey(2), (16, 16, 128), dtype=jnp.bfloat16)
    out3 = jax.block_until_ready(module(x3))
    ref3 = (jax.nn.softplus(x3.astype(jnp.float32)) - module.shift).astype(jnp.bfloat16)
    assert out3.dtype == jnp.bfloat16 and out3.shape == x3.shape
    assert float(jnp.max(jnp.abs(out3.astype(jnp.float32) - ref3.astype(jnp.float32)))) < 0.1

    # Tiny / non-lane-aligned size: handled by the fused XLA path (no pad/slice copies).
    x4 = jax.random.normal(jax.random.PRNGKey(3), (3, 5, 7), dtype=jnp.float32)
    out4 = jax.block_until_ready(module(x4))
    ref4 = jax.nn.softplus(x4) - module.shift
    assert out4.shape == x4.shape
    assert float(jnp.max(jnp.abs(out4 - ref4))) < 1e-5

    print("KERNEL_OK")
</pallas_src>

<mosaic_0001>
module attributes {stable_mosaic.version = 11 : i64} {
  func.func @_shifted_softplus_kernel(%arg0: i32, %arg1: memref<16x128xf32, #tpu.memory_space<vmem>>, %arg2: memref<16x128xf32, #tpu.memory_space<vmem>>) attributes {dimension_semantics = [#tpu.dimension_semantics<parallel>], iteration_bounds = array<i64: 1>, scalar_prefetch = 0 : i64, scratch_operands = 0 : i64, tpu.core_type = #tpu.core_type<tc>, window_params = [{transform_indices = @transform_0, window_bounds = array<i64: 16, 128>}, {transform_indices = @transform_1, window_bounds = array<i64: 16, 128>}]} {
    %c0 = arith.constant 0 : index
    %c0_0 = arith.constant 0 : index
    %0 = vector.load %arg1[%c0, %c0_0] : memref<16x128xf32, #tpu.memory_space<vmem>>, vector<16x128xf32>
    %cst = arith.constant 0.000000e+00 : f32
    %1 = vector.broadcast %cst : f32 to vector<16x128xf32>
    %2 = arith.maximumf %0, %1 : vector<16x128xf32>
    %3 = math.absf %0 : vector<16x128xf32>
    %cst_1 = arith.constant 0.000000e+00 : f32
    %4 = vector.broadcast %cst_1 : f32 to vector<16x128xf32>
    %5 = arith.subf %4, %3 : vector<16x128xf32>
    %6 = math.exp %5 : vector<16x128xf32>
    %7 = math.log1p %6 : vector<16x128xf32>
    %8 = arith.addf %2, %7 : vector<16x128xf32>
    %cst_2 = arith.constant 0.693147182 : f32
    %9 = vector.broadcast %cst_2 : f32 to vector<16x128xf32>
    %10 = arith.subf %8, %9 : vector<16x128xf32>
    %c0_3 = arith.constant 0 : index
    %c0_4 = arith.constant 0 : index
    %11 = vector.load %arg2[%c0_3, %c0_4] : memref<16x128xf32, #tpu.memory_space<vmem>>, vector<16x128xf32>
    tpu.vector_store %arg2[%c0_3, %c0_4], %10 {strides = array<i32>} : memref<16x128xf32, #tpu.memory_space<vmem>>, vector<16x128xf32>,
    return
  }
  func.func @transform_0(%arg0: i32) -> (i32, i32) {
    %c0_i32 = arith.constant 0 : i32
    %c0_i32_0 = arith.constant 0 : i32
    return %arg0, %c0_i32 : i32, i32
  }
  func.func @transform_1(%arg0: i32) -> (i32, i32) {
    %c0_i32 = arith.constant 0 : i32
    %c0_i32_0 = arith.constant 0 : i32
    return %arg0, %c0_i32 : i32, i32
  }
}

</mosaic_0001>

<llo_original>
// kernel: tpu_custom_call.1
$region0: #{tpu_custom_call.1}
  #allocation0 [shape = 'u32[]', space=smem, size = 0x4, offset = 0x4, fixed_abs, tag = 'smem constant byte address 0x4 - core index']
  #allocation1 [shape = 'u32[72,128]{1,0:T(1,128)}', space=vmem, size = 0x9000, scoped, tag = 'internal scratch']
  %s0 = inlined_call_operand.hbm [shape: f32[16,128], index: 0, kind: input, shape index: {}]
  %s1 = inlined_call_operand.hbm [shape: f32[16,128], index: 1, kind: output, shape index: {}]
  %s2 = sld [smem:[#allocation0]]
  $region18: #{tpu_custom_call.1} parent=0
    _
  %s4 = ssub.s32 1, %s2
  %s5 = scalar_select 0, %s4, %s2
  $region1: #{tpu_custom_call.1} parent=0
    #allocation2 [shape = 'u8[8192]{0}', space=vmem, size = 0x2000, scoped, tag = 'input window, operand 0, single buffered']
    #allocation3 [shape = 's32[1]{0}', space=sflag, size = 0x4, scoped, tag = 'scoped memory for tpu_custom_call.1']
    #allocation4 [shape = 's32[1]{0}', space=sflag, size = 0x4, scoped, tag = 'scoped memory for tpu_custom_call.1']
    #allocation5 [shape = 'u8[8192]{0}', space=vmem, size = 0x2000, scoped, tag = 'output window, operand 0, single buffered']
    %6 = vsyncpa [#allocation3], 0
    %7 = vsyncpa [#allocation4], 0
    // Predicated region
    $region2: #{tpu_custom_call.1} parent=1 // pred_check
      _
    $region3: #{tpu_custom_call.1} parent=1 // pred_check_branch
      %9 = sbr.rel (0) target = $region5
    $region4: #{tpu_custom_call.1} parent=1 // pred_region
      %11 = vsyncadd [#allocation3], 0
      %s12 = sshll.u32 %s0, 4
      %s13 = int_to_ptr.hbm [resolvable:$true] %s12
      %s14 = sshll.u32 [#allocation2], 4
      %s15 = int_to_ptr.vmem [resolvable:$true] %s14
      %20 = dma.hbm_to_vmem [thread:$0]  %s13, 256, %s15, [#allocation3], 128, 128, 8
    $region5: #{tpu_custom_call.1} parent=1 // pred_fallthru
      _
    // Predicated region
    $region6: #{tpu_custom_call.1} parent=1 // pred_check
      _
    $region7: #{tpu_custom_call.1} parent=1 // pred_check_branch
      %22 = sbr.rel (0) target = $region9
    $region8: #{tpu_custom_call.1} parent=1 // pred_region
      %24 = dma.done [#allocation3], 256
    $region9: #{tpu_custom_call.1} parent=1 // pred_fallthru
      _
    %v25 = vld [vmem:[#allocation2] sm:$0xff]
    %v26 = vld [vmem:[#allocation2 + $0x8] sm:$0xff]
    %v27 = vmax.f32 %v25, 0.0
    %v28 = vmax.f32 %v26, 0.0
    %v29 = vand.u32 2147483647, %v25
    %v30 = vand.u32 2147483647, %v26
    %v31 = vsub.f32 0.0, %v29
    %v32 = vsub.f32 0.0, %v30
    %v33 = vmul.f32 %v31, 1.442695
    %v34 = vpow.pop %v33
    %v35 = vmul.f32 %v32, 1.442695
    %v36 = vpow.pop %v35
    %v37 = vadd.f32 %v34, 1.0
    %v38 = vlog2.pop %v37
    %v39 = vmul.f32 %v38, 0.6931472
    %v40 = vmul.f32 -0.5, %v34
    %v41 = vadd.f32 %v40, 1.0
    %v42 = vmul.f32 %v41, %v34
    %v43 = vand.u32 2147483647, %v34
    %vm44 = vcmp.lt.f32.partialorder %v43, 0.0004427343
    %v45 = vsel %vm44, %v42, %v39
    %v46 = vadd.f32 %v36, 1.0
    %v47 = vlog2.pop %v46
    %v48 = vmul.f32 %v47, 0.6931472
    %v49 = vmul.f32 -0.5, %v36
    %v50 = vadd.f32 %v49, 1.0
    %v51 = vmul.f32 %v50, %v36
    %v52 = vand.u32 2147483647, %v36
    %vm53 = vcmp.lt.f32.partialorder %v52, 0.0004427343
    %v54 = vsel %vm53, %v51, %v48
    %v55 = vadd.f32 %v27, %v45
    %v56 = vadd.f32 %v28, %v54
    %v57 = vsub.f32 %v55, 0.6931472
    %v58 = vsub.f32 %v56, 0.6931472
    %59 = vst [vmem:[#allocation5] sm:$0xff] %v57
    %60 = vst [vmem:[#allocation5 + $0x8] sm:$0xff] %v58
    // Predicated region
    $region10: #{tpu_custom_call.1} parent=1 // pred_check
      _
    $region11: #{tpu_custom_call.1} parent=1 // pred_check_branch
      %62 = sbr.rel (0) target = $region13
    $region12: #{tpu_custom_call.1} parent=1 // pred_region
      %64 = vsyncadd [#allocation4], 0
      %s65 = sshll.u32 [#allocation5], 4
      %s66 = int_to_ptr.vmem [resolvable:$true] %s65
      %s67 = sshll.u32 %s1, 4
      %s68 = int_to_ptr.hbm [resolvable:$true] %s67
      %73 = dma.vmem_to_hbm [thread:$0]  %s66, 256, %s68, [#allocation4], 128, 128, 8
    $region13: #{tpu_custom_call.1} parent=1 // pred_fallthru
      _
    // Predicated region
    $region14: #{tpu_custom_call.1} parent=1 // pred_check
      _
    $region15: #{tpu_custom_call.1} parent=1 // pred_check_branch
      %75 = sbr.rel (0) target = $region17
    $region16: #{tpu_custom_call.1} parent=1 // pred_region
      %77 = dma.done [#allocation4], 256
    $region17: #{tpu_custom_call.1} parent=1 // pred_fallthru
      _
    %78 = vsyncpa [#allocation3], 1
    %79 = vsyncpa [#allocation4], 1

</llo_original>
